<compile_context>
chip_gen: v5e
topology: v5e:2x2
jax: 0.10.0
libtpu: 0.0.40
codegen_flags: <defaults>
</compile_context>

<pallas_src>
import functools

import jax
import jax.numpy as jnp
from jax import lax
from jax.experimental import pallas as pl
from jax.experimental.pallas import tpu as pltpu


# -----------------------------------------------------------------------------
# Pallas kernel 1: fused (im2col'd) conv  =  matmul + bias + optional ReLU
# -----------------------------------------------------------------------------
def _conv_mm_kernel(x_ref, w_ref, b_ref, o_ref, *, relu):
    # x_ref: (1, K, T)   w_ref: (Cout, K)   b_ref: (Cout, 1)   o_ref: (1, Cout, T)
    x = x_ref[0]                                                  # (K, T)
    acc = jnp.dot(w_ref[...], x, preferred_element_type=jnp.float32)  # (Cout, T)
    acc = acc + b_ref[...]                                        # lane-broadcast bias
    if relu:
        acc = jnp.maximum(acc, 0.0)
    o_ref[0] = acc.astype(o_ref.dtype)


@functools.lru_cache(maxsize=None)
def _build_conv7x7(B, Cin, Cout, H, W, relu):
    """Returns a jitted (x, w, b) -> y implementing a 7x7 'same' conv (stride 1)."""
    K = Cin * 49
    HW = H * W
    tile = 512 if (HW >= 512 and HW % 512 == 0) else HW          # lane-dense tiles
    grid = (B, HW // tile)

    conv_call = pl.pallas_call(
        functools.partial(_conv_mm_kernel, relu=relu),
        out_shape=jax.ShapeDtypeStruct((B, Cout, HW), jnp.float32),
        grid_spec=pltpu.PrefetchScalarGridSpec(
            num_scalar_prefetch=0,
            grid=grid,
            in_specs=[
                pl.BlockSpec((1, K, tile), lambda b, j: (b, 0, j)),
                pl.BlockSpec((Cout, K), lambda b, j: (0, 0)),      # resident weights
                pl.BlockSpec((Cout, 1), lambda b, j: (0, 0)),      # resident bias
            ],
            out_specs=pl.BlockSpec((1, Cout, tile), lambda b, j: (b, 0, j)),
        ),
        compiler_params=pltpu.CompilerParams(
            dimension_semantics=("parallel", "parallel"),
        ),
    )

    def conv(x, w, b):
        # x: (B, Cin, H, W), w: (Cout, Cin, 7, 7), b: (Cout,)
        xp = jnp.pad(x, ((0, 0), (0, 0), (3, 3), (3, 3)))
        cols = [lax.slice(xp, (0, 0, ky, kx), (B, Cin, ky + H, kx + W))
                for ky in range(7) for kx in range(7)]
        col = jnp.stack(cols, axis=2).reshape(B, K, HW)           # (B, Cin*49, H*W)
        w2 = w.reshape(Cout, K)
        b2 = b.reshape(Cout, 1)
        out = conv_call(col, w2, b2)
        return out.reshape(B, Cout, H, W)

    return jax.jit(conv)


def conv7x7(x, w, b, relu):
    B, Cin, H, W = x.shape
    Cout = w.shape[0]
    return _build_conv7x7(B, Cin, Cout, H, W, bool(relu))(x, w, b)


# -----------------------------------------------------------------------------
# Pallas kernel 2: fused single-pass sum-of-squared-differences (mirror check)
# -----------------------------------------------------------------------------
def _ssd_kernel(a_ref, b_ref, o_ref):
    @pl.when(pl.program_id(0) == 0)
    def _():
        o_ref[...] = jnp.zeros_like(o_ref)
    d = a_ref[...] - b_ref[...]
    o_ref[...] += jnp.sum(d * d)


@functools.lru_cache(maxsize=None)
def _build_ssd(n_elems):
    LANES = 128
    BLOCK_ROWS = 256
    block = BLOCK_ROWS * LANES
    padded = ((n_elems + block - 1) // block) * block
    rows = padded // LANES
    nblocks = rows // BLOCK_ROWS

    call = pl.pallas_call(
        _ssd_kernel,
        out_shape=jax.ShapeDtypeStruct((1, 1), jnp.float32),
        grid_spec=pltpu.PrefetchScalarGridSpec(
            num_scalar_prefetch=0,
            grid=(nblocks,),
            in_specs=[
                pl.BlockSpec((BLOCK_ROWS, LANES), lambda i: (i, 0)),
                pl.BlockSpec((BLOCK_ROWS, LANES), lambda i: (i, 0)),
            ],
            out_specs=pl.BlockSpec((1, 1), lambda i: (0, 0)),      # resident accumulator
        ),
        compiler_params=pltpu.CompilerParams(dimension_semantics=("arbitrary",)),
    )

    def ssd(a, b):
        a = a.reshape(-1).astype(jnp.float32)
        b = b.reshape(-1).astype(jnp.float32)
        pad = padded - n_elems
        if pad:
            a = jnp.pad(a, (0, pad))
            b = jnp.pad(b, (0, pad))
        return call(a.reshape(rows, LANES), b.reshape(rows, LANES))[0, 0]

    return jax.jit(ssd)


def check_if_mirror_extended(lrs):
    """torch: if t even and norm(first_half - flip(second_half)) == 0."""
    _, t = lrs.shape[0], lrs.shape[1]
    if t % 2 != 0:
        return False
    half = t // 2
    a = lrs[:, :half]
    b = jnp.flip(lrs[:, half:], axis=1)
    ssd = _build_ssd(a.size)(a, b)
    return bool(jax.device_get(ssd) == 0.0)


# -----------------------------------------------------------------------------
# SPyNet (plain-JAX glue around the Pallas conv kernel)
# -----------------------------------------------------------------------------
IMG_MEAN = jnp.array([0.485, 0.456, 0.406], jnp.float32).reshape(1, 3, 1, 1)
IMG_STD = jnp.array([0.229, 0.224, 0.225], jnp.float32).reshape(1, 3, 1, 1)


def avg_pool2x2(x):
    B, C, H, W = x.shape
    return x.reshape(B, C, H // 2, 2, W // 2, 2).mean(axis=(3, 5))


def upsample2x_flow(flow):
    """F.interpolate(scale_factor=2, mode='bilinear', align_corners=True) * 2.0."""
    B, C, H, W = flow.shape
    H2, W2 = 2 * H, 2 * W

    def lin_idx(n_out, n_in):
        if n_in == 1:
            z = jnp.zeros((n_out,), jnp.int32)
            return z, z, jnp.zeros((n_out,), jnp.float32)
        src = jnp.arange(n_out, dtype=jnp.float32) * (n_in - 1) / (n_out - 1)
        i0 = jnp.clip(jnp.floor(src).astype(jnp.int32), 0, n_in - 2)
        i1 = i0 + 1
        frac = src - i0.astype(jnp.float32)
        return i0, i1, frac

    y0, y1, fy = lin_idx(H2, H)
    x0, x1, fx = lin_idx(W2, W)
    rows = (flow[:, :, y0, :] * (1.0 - fy)[None, None, :, None]
            + flow[:, :, y1, :] * fy[None, None, :, None])
    out = (rows[:, :, :, x0] * (1.0 - fx)[None, None, None, :]
           + rows[:, :, :, x1] * fx[None, None, None, :])
    return out * 2.0


def flow_warp(x, flow):
    """grid_sample(bilinear, padding_mode='border', align_corners=True) with pixel flow.

    TODO(synk): gather-based warp kept in plain JAX; a Pallas version would need
    manual DMA gather (data-dependent addressing) which BlockSpecs cannot express.
    """
    B, C, H, W = x.shape
    gy, gx = jnp.meshgrid(jnp.arange(H, dtype=jnp.float32),
                          jnp.arange(W, dtype=jnp.float32), indexing="ij")
    sx = gx[None, :, :] + flow[..., 0]
    sy = gy[None, :, :] + flow[..., 1]
    x0 = jnp.floor(sx)
    y0 = jnp.floor(sy)
    wx = sx - x0
    wy = sy - y0
    x0i = jnp.clip(x0.astype(jnp.int32), 0, W - 1)
    x1i = jnp.clip(x0.astype(jnp.int32) + 1, 0, W - 1)
    y0i = jnp.clip(y0.astype(jnp.int32), 0, H - 1)
    y1i = jnp.clip(y0.astype(jnp.int32) + 1, 0, H - 1)

    xf = x.reshape(B, C, H * W)

    def gather(yi, xi):
        idx = (yi * W + xi).reshape(B, 1, H * W)
        idx = jnp.broadcast_to(idx, (B, C, H * W))
        return jnp.take_along_axis(xf, idx, axis=2).reshape(B, C, H, W)

    v00, v01 = gather(y0i, x0i), gather(y0i, x1i)
    v10, v11 = gather(y1i, x0i), gather(y1i, x1i)
    wx = wx[:, None]
    wy = wy[:, None]
    top = v00 * (1.0 - wx) + v01 * wx
    bot = v10 * (1.0 - wx) + v11 * wx
    return top * (1.0 - wy) + bot * wy


def run_basic_module(x, module_params):
    """SPyNetBasicModule: 7x7 convs 8->32->64->32->16->2, ReLU between (not after last)."""
    h = x
    n_layers = len(module_params)
    for i, (w, b) in enumerate(module_params):
        h = conv7x7(h, w, b, relu=(i < n_layers - 1))
    return h


def spynet_compute_flow(ref, supp, params):
    n, _, h, w = ref.shape
    refs = [(ref - IMG_MEAN) / IMG_STD]
    supps = [(supp - IMG_MEAN) / IMG_STD]
    for _ in range(5):
        refs.append(avg_pool2x2(refs[-1]))
        supps.append(avg_pool2x2(supps[-1]))
    refs = refs[::-1]
    supps = supps[::-1]

    flow = jnp.zeros((n, 2, h // 32, w // 32), jnp.float32)
    for level in range(len(refs)):
        flow_up = flow if level == 0 else upsample2x_flow(flow)
        warped = flow_warp(supps[level], jnp.transpose(flow_up, (0, 2, 3, 1)))
        inp = jnp.concatenate([refs[level], warped, flow_up], axis=1)   # (n, 8, hl, wl)
        flow = flow_up + run_basic_module(inp, params[level])
    return flow


def spynet_forward(ref, supp, params):
    h, w = ref.shape[2], ref.shape[3]
    if h % 32 != 0 or w % 32 != 0:
        # TODO(synk): SPyNet.forward bilinearly resizes non-multiple-of-32 inputs and
        # rescales the flow; not needed for the demo shapes here.
        raise NotImplementedError("h and w must be multiples of 32 in this script")
    return spynet_compute_flow(ref, supp, params)


# -----------------------------------------------------------------------------
# Flow_spynet.forward
# -----------------------------------------------------------------------------
def flow_spynet_forward(lrs, params):
    n, t, c, h, w = lrs.shape
    assert h >= 64 and w >= 64, (
        f"The height and width of inputs should be at least 64, but got {h} and {w}.")

    is_mirror_extended = check_if_mirror_extended(lrs)

    lrs_1 = jnp.concatenate([lrs[:, :1], lrs], axis=1).reshape(-1, c, h, w)
    lrs_2 = jnp.concatenate([lrs, lrs[:, t - 1:t]], axis=1).reshape(-1, c, h, w)

    flows_backward = spynet_forward(lrs_1, lrs_2, params).reshape(n, t + 1, 2, h, w)
    flows_backward = flows_backward[:, 1:]

    if is_mirror_extended:
        flows_forward = None
    else:
        flows_forward = spynet_forward(lrs_2, lrs_1, params).reshape(n, t + 1, 2, h, w)
        flows_forward = flows_forward[:, :-1]
    return flows_forward, flows_backward


def init_spynet_params(key):
    # TODO(synk): the original loads pretrained SPyNet weights; deterministic
    # Kaiming-style random init is used here (spynet_pretrained=None path).
    layer_io = [(8, 32), (32, 64), (64, 32), (32, 16), (16, 2)]
    params = []
    for _ in range(6):
        module = []
        for cin, cout in layer_io:
            key, k1 = jax.random.split(key)
            fan_in = cin * 49
            w = jax.random.normal(k1, (cout, cin, 7, 7), jnp.float32) * (2.0 / fan_in) ** 0.5
            b = jnp.zeros((cout,), jnp.float32)
            module.append((w, b))
        params.append(module)
    return params


# -----------------------------------------------------------------------------
if __name__ == "__main__":
    key = jax.random.PRNGKey(0)
    k_data, k_params = jax.random.split(key)

    # Smallest shapes allowed by the module's assert (h, w >= 64).
    n, t, c, h, w = 1, 2, 3, 64, 64
    lrs = jax.random.uniform(k_data, (n, t, c, h, w), dtype=jnp.float32)
    params = init_spynet_params(k_params)

    # --- Self-check: Pallas conv kernel vs plain-JAX conv reference ------------
    xs = jax.random.normal(jax.random.PRNGKey(7), (3, 8, 8, 8), jnp.float32)
    wt, bt = params[0][0]
    out_pl = conv7x7(xs, wt, bt, relu=True)
    out_ref = lax.conv_general_dilated(
        xs, wt, window_strides=(1, 1), padding=((3, 3), (3, 3)),
        dimension_numbers=("NCHW", "OIHW", "NCHW"),
        precision=lax.Precision.HIGHEST) + bt[None, :, None, None]
    out_ref = jnp.maximum(out_ref, 0.0)
    assert jnp.allclose(out_pl, out_ref, atol=5e-3, rtol=5e-3), "conv kernel mismatch"

    # --- Self-check: Pallas SSD reduction kernel -------------------------------
    a = jax.random.normal(jax.random.PRNGKey(3), (5, 7, 13), jnp.float32)
    b = jax.random.normal(jax.random.PRNGKey(4), (5, 7, 13), jnp.float32)
    ssd_pl = _build_ssd(a.size)(a, b)
    assert jnp.allclose(ssd_pl, jnp.sum((a - b) ** 2), atol=1e-2, rtol=1e-4), "ssd mismatch"

    # --- Mirror-extended check semantics ----------------------------------------
    lrs_mirror = jnp.concatenate([lrs, jnp.flip(lrs, axis=1)], axis=1)
    assert check_if_mirror_extended(lrs_mirror)          # mirror-extended -> True
    assert not check_if_mirror_extended(lrs)             # random frames  -> False

    # --- Full Flow_spynet forward -----------------------------------------------
    flows_forward, flows_backward = flow_spynet_forward(lrs, params)
    flows_backward = jax.block_until_ready(flows_backward)
    flows_forward = jax.block_until_ready(flows_forward)

    assert flows_backward.shape == (n, t, 2, h, w)
    assert flows_forward is not None and flows_forward.shape == (n, t, 2, h, w)
    assert bool(jnp.isfinite(flows_backward).all())
    assert bool(jnp.isfinite(flows_forward).all())

    print("KERNEL_OK")
</pallas_src>

<mosaic_0001>
module attributes {stable_mosaic.version = 11 : i64} {
  func.func @_conv_mm_kernel(%arg0: i32, %arg1: i32, %arg2: memref<1x392x64xf32, #tpu.memory_space<vmem>>, %arg3: memref<32x392xf32, #tpu.memory_space<vmem>>, %arg4: memref<32x1xf32, #tpu.memory_space<vmem>>, %arg5: memref<1x32x64xf32, #tpu.memory_space<vmem>>) attributes {dimension_semantics = [#tpu.dimension_semantics<parallel>, #tpu.dimension_semantics<parallel>], iteration_bounds = array<i64: 3, 1>, scalar_prefetch = 0 : i64, scratch_operands = 0 : i64, tpu.core_type = #tpu.core_type<tc>, window_params = [{transform_indices = @transform_0, window_bounds = array<i64: 1, 392, 64>}, {pipeline_mode = #tpu.pipeline_mode<synchronous>, transform_indices = @transform_1, window_bounds = array<i64: 32, 392>}, {pipeline_mode = #tpu.pipeline_mode<synchronous>, transform_indices = @transform_2, window_bounds = array<i64: 32, 1>}, {transform_indices = @transform_3, window_bounds = array<i64: 1, 32, 64>}]} {
    %c0 = arith.constant 0 : index
    %c0_0 = arith.constant 0 : index
    %c0_1 = arith.constant 0 : index
    %0 = vector.load %arg2[%c0, %c0_0, %c0_1] : memref<1x392x64xf32, #tpu.memory_space<vmem>>, vector<1x392x64xf32>
    %1 = vector.shape_cast %0 : vector<1x392x64xf32> to vector<392x64xf32>
    %c0_2 = arith.constant 0 : index
    %c0_3 = arith.constant 0 : index
    %2 = vector.load %arg3[%c0_2, %c0_3] : memref<32x392xf32, #tpu.memory_space<vmem>>, vector<32x392xf32>
    %cst = arith.constant dense<0.000000e+00> : vector<32x64xf32>
    %3 = tpu.matmul %2, %1, %cst {dimension_numbers = #tpu.dot_dimension_numbers<[1], [0], [0], [1], [0, 0, 1, 1], [], []>} : vector<32x392xf32>, vector<392x64xf32>, vector<32x64xf32> -> vector<32x64xf32>
    %c0_4 = arith.constant 0 : index
    %c0_5 = arith.constant 0 : index
    %4 = vector.load %arg4[%c0_4, %c0_5] : memref<32x1xf32, #tpu.memory_space<vmem>>, vector<32x1xf32>
    %5 = vector.broadcast %4 : vector<32x1xf32> to vector<32x64xf32>
    %6 = arith.addf %3, %5 : vector<32x64xf32>
    %cst_6 = arith.constant 0.000000e+00 : f32
    %7 = vector.broadcast %cst_6 : f32 to vector<32x64xf32>
    %8 = arith.maximumf %6, %7 : vector<32x64xf32>
    %c0_7 = arith.constant 0 : index
    %c0_8 = arith.constant 0 : index
    %c0_9 = arith.constant 0 : index
    %9 = vector.load %arg5[%c0_7, %c0_8, %c0_9] : memref<1x32x64xf32, #tpu.memory_space<vmem>>, vector<1x32x64xf32>
    %10 = vector.shape_cast %9 : vector<1x32x64xf32> to vector<32x64xf32>
    %11 = vector.shape_cast %8 : vector<32x64xf32> to vector<1x32x64xf32>
    tpu.vector_store %arg5[%c0_7, %c0_8, %c0_9], %11 {strides = array<i32>} : memref<1x32x64xf32, #tpu.memory_space<vmem>>, vector<1x32x64xf32>,
    return
  }
  func.func @transform_0(%arg0: i32, %arg1: i32) -> (i32, i32, i32) {
    %c0_i32 = arith.constant 0 : i32
    %c0_i32_0 = arith.constant 0 : i32
    return %arg0, %c0_i32, %arg1 : i32, i32, i32
  }
  func.func @transform_1(%arg0: i32, %arg1: i32) -> (i32, i32) {
    %c0_i32 = arith.constant 0 : i32
    %c0_i32_0 = arith.constant 0 : i32
    %c0_i32_1 = arith.constant 0 : i32
    return %c0_i32, %c0_i32_0 : i32, i32
  }
  func.func @transform_2(%arg0: i32, %arg1: i32) -> (i32, i32) {
    %c0_i32 = arith.constant 0 : i32
    %c0_i32_0 = arith.constant 0 : i32
    %c0_i32_1 = arith.constant 0 : i32
    return %c0_i32, %c0_i32_0 : i32, i32
  }
  func.func @transform_3(%arg0: i32, %arg1: i32) -> (i32, i32, i32) {
    %c0_i32 = arith.constant 0 : i32
    %c0_i32_0 = arith.constant 0 : i32
    return %arg0, %c0_i32, %arg1 : i32, i32, i32
  }
}

</mosaic_0001>

<llo_original>
// kernel: conv.1
$region0: #{conv.1}
  #allocation0 [shape = 'u32[]', space=smem, size = 0x4, offset = 0x4, fixed_abs, tag = 'smem constant byte address 0x4 - core index']
  #allocation1 [shape = 'u32[72,128]{1,0:T(1,128)}', space=vmem, size = 0x9000, scoped, tag = 'internal scratch']
  %s0 = inlined_call_operand.vmem [shape: f32[3,392,64], index: 0, kind: input, shape index: {}]
  %s1 = inlined_call_operand.vmem [shape: f32[32,392], index: 1, kind: input, shape index: {}]
  %s2 = inlined_call_operand.vmem [shape: f32[32,1], index: 2, kind: input, shape index: {}]
  %s3 = inlined_call_operand.vmem [shape: f32[3,32,64], index: 3, kind: output, shape index: {}]
  %s4 = sld [smem:[#allocation0]]
  $region45: #{conv.1} parent=0
    _
  %s6 = ssub.s32 1, %s4
  %s7 = scalar_select 0, %s6, %s4
  loop: start=0, step=1, limit=5
  $region2: #{conv.1} parent=0 // loop_pre_header
    _
  $region3: #{conv.1} parent=0 // loop_header
    %s9 = sphi 0, %s13
    %p10 = scmp.ge.s32.totalorder %s9, 5
    %s16 = sphi 0, %s28
    %s17 = sphi 0, %s24
    %s18 = sphi 0, %s16
    %s19 = sphi 0, %s17
    %s20 = sphi 0, %s18
    %s21 = sphi 0, %s19
    %s33 = sphi 0, %s35
    %s36 = sphi 0, %s33
    %s37 = sphi 0, %s36
    %s53 = sphi 0, %s37
    %s57 = sphi 0, %s57
    %s59 = sphi 0, %s57
    %s60 = sphi 0, %s59
    %s74 = sphi 0, %s60
    %s78 = sphi 0, %s78
    %s80 = sphi 0, %s78
    %s81 = sphi 0, %s80
    %s95 = sphi 0, %s81
    %s103 = sphi 0, %s105
    %s106 = sphi 0, %s103
    %s107 = sphi 0, %s106
    %s123 = sphi 0, %s107
  $region4: #{conv.1} parent=0 // loop_header_branch
    %12 = sbr.rel (%p10) target = $region8
  $region5: #{conv.1} parent=0 // loop_body
    %s14 = ssub.s32 %s9, 1
    %s15 = ssub.s32 %s9, 2
    %s22 = sadd.s32 1, %s17
    %p23 = scmp.ge.s32.totalorder %s22, 1
    %s24 = scalar_select %p23, 0, %s22
    %s25 = sadd.s32 1, %s16
    %s26 = scalar_select %p23, %s25, %s16
    %p27 = scmp.ge.s32.totalorder %s26, 3
    %s28 = scalar_select %p27, 0, %s26
    %s29 = ssub.s32 %s16, %s28
    %s30 = ssub.s32 %s17, %s24
    %s31 = sor.u32 %s29, %s30
    %p32 = scmp.eq.s32.totalorder %s31, 0
    %s34 = sadd.s32 %s33, 1
    %s35 = scalar_select %p32, %s33, %s34
    %p38 = pneg %p32
    %p39 = scmp.eq.s32.totalorder %s9, 2
    %p40 = por %p38, %p39
    %p41 = scmp.ne.s32.totalorder %s33, %s36
    %p42 = scmp.eq.s32.totalorder %s9, 0
    %p43 = por %p41, %p42
    %p44 = scmp.ne.s32.totalorder %s33, %s36
    %p45 = scmp.eq.s32.totalorder %s14, 2
    %p46 = por %p44, %p45
    %p47 = scmp.ne.s32.totalorder %s36, %s37
    %p48 = scmp.eq.s32.totalorder %s14, 0
    %p49 = por %p47, %p48
    %p50 = scmp.ne.s32.totalorder %s36, %s37
    %p51 = scmp.eq.s32.totalorder %s15, 2
    %p52 = por %p50, %p51
    %p54 = scmp.ne.s32.totalorder %s37, %s53
    %p55 = scmp.eq.s32.totalorder %s15, 0
    %p56 = por %p54, %p55
    %s58 = sadd.s32 %s57, 1
    %p61 = scmp.eq.s32.totalorder %s9, 2
    %p62 = scmp.ne.s32.totalorder %s57, %s59
    %p63 = scmp.eq.s32.totalorder %s9, 0
    %p64 = por %p62, %p63
    %p65 = scmp.ne.s32.totalorder %s57, %s59
    %p66 = scmp.eq.s32.totalorder %s14, 2
    %p67 = por %p65, %p66
    %p68 = scmp.ne.s32.totalorder %s59, %s60
    %p69 = scmp.eq.s32.totalorder %s14, 0
    %p70 = por %p68, %p69
    %p71 = scmp.ne.s32.totalorder %s59, %s60
    %p72 = scmp.eq.s32.totalorder %s15, 2
    %p73 = por %p71, %p72
    %p75 = scmp.ne.s32.totalorder %s60, %s74
    %p76 = scmp.eq.s32.totalorder %s15, 0
    %p77 = por %p75, %p76
    %s79 = sadd.s32 %s78, 1
    %p82 = scmp.eq.s32.totalorder %s9, 2
    %p83 = scmp.ne.s32.totalorder %s78, %s80
    %p84 = scmp.eq.s32.totalorder %s9, 0
    %p85 = por %p83, %p84
    %p86 = scmp.ne.s32.totalorder %s78, %s80
    %p87 = scmp.eq.s32.totalorder %s14, 2
    %p88 = por %p86, %p87
    %p89 = scmp.ne.s32.totalorder %s80, %s81
    %p90 = scmp.eq.s32.totalorder %s14, 0
    %p91 = por %p89, %p90
    %p92 = scmp.ne.s32.totalorder %s80, %s81
    %p93 = scmp.eq.s32.totalorder %s15, 2
    %p94 = por %p92, %p93
    %p96 = scmp.ne.s32.totalorder %s81, %s95
    %p97 = scmp.eq.s32.totalorder %s15, 0
    %p98 = por %p96, %p97
    %s99 = ssub.s32 %s16, %s28
    %s100 = ssub.s32 %s17, %s24
    %s101 = sor.u32 %s99, %s100
    %p102 = scmp.eq.s32.totalorder %s101, 0
    %s104 = sadd.s32 %s103, 1
    %s105 = scalar_select %p102, %s103, %s104
    %p108 = pneg %p102
    %p109 = scmp.eq.s32.totalorder %s9, 2
    %p110 = por %p108, %p109
    %p111 = scmp.ne.s32.totalorder %s103, %s106
    %p112 = scmp.eq.s32.totalorder %s9, 0
    %p113 = por %p111, %p112
    %p114 = scmp.ne.s32.totalorder %s103, %s106
    %p115 = scmp.eq.s32.totalorder %s14, 2
    %p116 = por %p114, %p115
    %p117 = scmp.ne.s32.totalorder %s106, %s107
    %p118 = scmp.eq.s32.totalorder %s14, 0
    %p119 = por %p117, %p118
    %p120 = scmp.ne.s32.totalorder %s106, %s107
    %p121 = scmp.eq.s32.totalorder %s15, 2
    %p122 = por %p120, %p121
    %p124 = scmp.ne.s32.totalorder %s107, %s123
    %p125 = scmp.eq.s32.totalorder %s15, 0
    %p126 = por %p124, %p125
    %p127 = scmp.le.s32.totalorder 1, %s9
    %p128 = scmp.lt.s32.totalorder %s9, 4
    %p129 = pnand %p127, %p128
    %p130 = pneg %p129
    // Predicated region
    $region9: #{conv.1} parent=5 // pred_check
      _
    $region10: #{conv.1} parent=5 // pred_check_branch
      %132 = sbr.rel (%p129) target = $region12
    $region11: #{conv.1} parent=5 // pred_region
      %s133 = ssub.s32 %s9, 1
      // Predicated region
      $region13: #{conv.1} parent=11 // pred_check
        %p134 = pneg %p70
      $region14: #{conv.1} parent=11 // pred_check_branch
        %136 = sbr.rel (%p134) target = $region16
      $region15: #{conv.1} parent=11 // pred_region
        _
      $region16: #{conv.1} parent=11 // pred_fallthru
        _
      // Predicated region
      $region17: #{conv.1} parent=11 // pred_check
        %p137 = pneg %p91
      $region18: #{conv.1} parent=11 // pred_check_branch
        %139 = sbr.rel (%p137) target = $region20
      $region19: #{conv.1} parent=11 // pred_region
        _
      $region20: #{conv.1} parent=11 // pred_fallthru
        _
    $region12: #{conv.1} parent=5 // pred_fallthru
      _
    %p140 = scmp.lt.s32.totalorder %s9, 3
    // Predicated region
    $region21: #{conv.1} parent=5 // pred_check
      %p141 = pneg %p140
    $region22: #{conv.1} parent=5 // pred_check_branch
      %143 = sbr.rel (%p141) target = $region24
    $region23: #{conv.1} parent=5 // pred_region
      // Predicated region
      $region25: #{conv.1} parent=23 // pred_check
        %p144 = pneg %p43
      $region26: #{conv.1} parent=23 // pred_check_branch
        %146 = sbr.rel (%p144) target = $region28
      $region27: #{conv.1} parent=23 // pred_region
        %p147 = scmp.lt.s32.totalorder %s16, 2
        %s148 = scalar_select %p147, %s16, 2
        %p149 = scmp.lt.s32.totalorder %s17, 0
        %s150 = scalar_select %p149, %s17, 0
        %s151 = smul.addr %s148, 49
        %s152 = sadd.s32 %s150, %s151
        %s153 = smul.addr %s152, 8
        %s154 = scalar_lea.vmem %s0, %s153
      $region28: #{conv.1} parent=23 // pred_fallthru
        _
    $region24: #{conv.1} parent=5 // pred_fallthru
      _
    %p155 = scmp.le.s32.totalorder 1, %s9
    %p156 = scmp.lt.s32.totalorder %s9, 4
    %p157 = pnand %p155, %p156
    %p158 = pneg %p157
    // Predicated region
    $region29: #{conv.1} parent=5 // pred_check
      _
    $region30: #{conv.1} parent=5 // pred_check_branch
      %160 = sbr.rel (%p157) target = $region32
    $region31: #{conv.1} parent=5 // pred_region
      %s161 = ssub.s32 %s9, 1
      %p162 = scmp.lt.s32.totalorder %s18, 2
      %s163 = scalar_select %p162, %s18, 2
      %p164 = scmp.lt.s32.totalorder %s19, 0
      %s165 = scalar_select %p164, %s19, 0
      %s166 = smul.addr %s163, 49
      %s167 = sadd.s32 %s165, %s166
      %s168 = smul.addr %s167, 8
      %s169 = scalar_lea.vmem %s0, %s168
      %p170 = pneg %p49
      %p171 = pneg %p46
      %p172 = pneg %p70
      %p173 = pneg %p67
      %p174 = pneg %p91
      %p175 = pneg %p88
      %p176 = pneg %p119
      %p177 = pneg %p116
      %p178 = scmp.lt.s32.totalorder %s18, 2
      %s179 = scalar_select %p178, %s18, 2
      %p180 = scmp.lt.s32.totalorder %s19, 0
      %s181 = scalar_select %p180, %s19, 0
      %s182 = smul.addr %s179, 4
      %s183 = sadd.s32 %s181, %s182
      %s184 = smul.addr %s183, 8
      %s185 = scalar_lea.vmem %s3, %s184
      %p186 = scmp.lt.s32.totalorder %s18, 2
      %s187 = scalar_select %p186, %s18, 2
      %p188 = scmp.lt.s32.totalorder %s19, 0
      %s189 = scalar_select %p188, %s19, 0
      %s190 = smul.addr %s187, 49
      %s191 = sadd.s32 %s189, %s190
      %s192 = smul.addr %s191, 8
      %s193 = scalar_lea.vmem %s0, %s192
      %p194 = scmp.lt.s32.totalorder %s18, 2
      %s195 = scalar_select %p194, %s18, 2
      %p196 = scmp.lt.s32.totalorder %s19, 0
      %s197 = scalar_select %p196, %s19, 0
      %s198 = smul.addr %s195, 4
      %s199 = sadd.s32 %s197, %s198
      %s200 = smul.addr %s199, 8
      %s201 = scalar_lea.vmem %s3, %s200
      %v202 = vld [vmem:[%s193] sm:$0xff]
      %v203 = vld [vmem:[%s193 + $0x8] sm:$0xff]
      %v204 = vld [vmem:[%s193 + $0x10] sm:$0xff]
      %v205 = vld [vmem:[%s193 + $0x18] sm:$0xff]
      %v206 = vld [vmem:[%s193 + $0x20] sm:$0xff]
      %v207 = vld [vmem:[%s193 + $0x28] sm:$0xff]
      %v208 = vld [vmem:[%s193 + $0x30] sm:$0xff]
      %v209 = vld [vmem:[%s193 + $0x38] sm:$0xff]
      %v210 = vld [vmem:[%s193 + $0x40] sm:$0xff]
      %v211 = vld [vmem:[%s193 + $0x48] sm:$0xff]
      %v212 = vld [vmem:[%s193 + $0x50] sm:$0xff]
      %v213 = vld [vmem:[%s193 + $0x58] sm:$0xff]
      %v214 = vld [vmem:[%s193 + $0x60] sm:$0xff]
      %v215 = vld [vmem:[%s193 + $0x68] sm:$0xff]
      %v216 = vld [vmem:[%s193 + $0x70] sm:$0xff]
      %v217 = vld [vmem:[%s193 + $0x78] sm:$0xff]
      %v218 = vld [vmem:[%s193 + $0x80] sm:$0xff]
      %v219 = vld [vmem:[%s193 + $0x88] sm:$0xff]
      %v220 = vld [vmem:[%s193 + $0x90] sm:$0xff]
      %v221 = vld [vmem:[%s193 + $0x98] sm:$0xff]
      %v222 = vld [vmem:[%s193 + $0xa0] sm:$0xff]
      %v223 = vld [vmem:[%s193 + $0xa8] sm:$0xff]
      %v224 = vld [vmem:[%s193 + $0xb0] sm:$0xff]
      %v225 = vld [vmem:[%s193 + $0xb8] sm:$0xff]
      %v226 = vld [vmem:[%s193 + $0xc0] sm:$0xff]
      %v227 = vld [vmem:[%s193 + $0xc8] sm:$0xff]
      %v228 = vld [vmem:[%s193 + $0xd0] sm:$0xff]
      %v229 = vld [vmem:[%s193 + $0xd8] sm:$0xff]
      %v230 = vld [vmem:[%s193 + $0xe0] sm:$0xff]
      %v231 = vld [vmem:[%s193 + $0xe8] sm:$0xff]
      %v232 = vld [vmem:[%s193 + $0xf0] sm:$0xff]
      %v233 = vld [vmem:[%s193 + $0xf8] sm:$0xff]
      %v234 = vld [vmem:[%s193 + $0x100] sm:$0xff]
      %v235 = vld [vmem:[%s193 + $0x108] sm:$0xff]
      %v236 = vld [vmem:[%s193 + $0x110] sm:$0xff]
      %v237 = vld [vmem:[%s193 + $0x118] sm:$0xff]
      %v238 = vld [vmem:[%s193 + $0x120] sm:$0xff]
      %v239 = vld [vmem:[%s193 + $0x128] sm:$0xff]
      %v240 = vld [vmem:[%s193 + $0x130] sm:$0xff]
      %v241 = vld [vmem:[%s193 + $0x138] sm:$0xff]
      %v242 = vld [vmem:[%s193 + $0x140] sm:$0xff]
      %v243 = vld [vmem:[%s193 + $0x148] sm:$0xff]
      %v244 = vld [vmem:[%s193 + $0x150] sm:$0xff]
      %v245 = vld [vmem:[%s193 + $0x158] sm:$0xff]
      %v246 = vld [vmem:[%s193 + $0x160] sm:$0xff]
      %v247 = vld [vmem:[%s193 + $0x168] sm:$0xff]
      %v248 = vld [vmem:[%s193 + $0x170] sm:$0xff]
      %v249 = vld [vmem:[%s193 + $0x178] sm:$0xff]
      %v250 = vld [vmem:[%s193 + $0x180] sm:$0xff]
      %v251 = vld [vmem:[%s1] sm:$0xff]
      %v252 = vld [vmem:[%s1 + $0x8] sm:$0xff]
      %v253 = vld [vmem:[%s1 + $0x10] sm:$0xff]
      %v254 = vld [vmem:[%s1 + $0x18] sm:$0xff]
      %v255 = vld [vmem:[%s1 + $0x20] sm:$0xff]
      %v256 = vld [vmem:[%s1 + $0x28] sm:$0xff]
      %v257 = vld [vmem:[%s1 + $0x30] sm:$0xff]
      %v258 = vld [vmem:[%s1 + $0x38] sm:$0xff]
      %v259 = vld [vmem:[%s1 + $0x40] sm:$0xff]
      %v260 = vld [vmem:[%s1 + $0x48] sm:$0xff]
      %v261 = vld [vmem:[%s1 + $0x50] sm:$0xff]
      %v262 = vld [vmem:[%s1 + $0x58] sm:$0xff]
      %v263 = vld [vmem:[%s1 + $0x60] sm:$0xff]
      %v264 = vld [vmem:[%s1 + $0x68] sm:$0xff]
      %v265 = vld [vmem:[%s1 + $0x70] sm:$0xff]
      %v266 = vld [vmem:[%s1 + $0x78] sm:$0xff]
      %v267 = vld [vmem:[%s2] sm:$0xff]
      %v268 = vld [vmem:[%s2 + $0x8] sm:$0xff]
      %v269 = vld [vmem:[%s2 + $0x10] sm:$0xff]
      %v270 = vld [vmem:[%s2 + $0x18] sm:$0xff]
      %272 = vset.pattern.permute.xlu0 0
      %273 = vperm.xlu0 %272, %v267
      %v274 = vpop.permute.xlu0 %273
      %277 = vset.pattern.permute.xlu0 0
      %278 = vperm.xlu0 %277, %v268
      %v279 = vpop.permute.xlu0 %278
      %282 = vset.pattern.permute.xlu0 0
      %283 = vperm.xlu0 %282, %v269
      %v284 = vpop.permute.xlu0 %283
      %287 = vset.pattern.permute.xlu0 0
      %288 = vperm.xlu0 %287, %v270
      %v289 = vpop.permute.xlu0 %288
      %vm291 = vcmask 64512
      %v293 = vsel %vm291, %v254, 0
      %v296 = vsel %vm291, %v258, 0
      %v299 = vsel %vm291, %v262, 0
      %v302 = vsel %vm291, %v266, 0
      %304 = vmatpush.msra.mxu0 %v217
      %305 = vmatpush.msra.mxu0 %v216
      %306 = vmatpush.msra.mxu0 %v215
      %307 = vmatpush.msra.mxu0 %v214
      %308 = vmatpush.msra.mxu0 %v213
      %309 = vmatpush.msra.mxu0 %v212
      %310 = vmatpush.msra.mxu0 %v211
      %311 = vmatpush.msra.mxu0 %v210
      %312 = vmatpush.msra.mxu0 %v209
      %313 = vmatpush.msra.mxu0 %v208
      %314 = vmatpush.msra.mxu0 %v207
      %315 = vmatpush.msra.mxu0 %v206
      %316 = vmatpush.msra.mxu0 %v205
      %317 = vmatpush.msra.mxu0 %v204
      %318 = vmatpush.msra.mxu0 %v203
      %319 = vmatpush.msra.mxu0 %v202
      %320 = vmatmul.f32.gmra.mxu0 %v251
      %v321 = vpop.f32.mrf.mxu0
      %v322 = vadd.f32 %v274, %v321
      %323 = vmatmul.f32.gmra.mxu0 %v255
      %v324 = vpop.f32.mrf.mxu0
      %v325 = vadd.f32 %v279, %v324
      %326 = vmatmul.f32.gmra.mxu0 %v259
      %v327 = vpop.f32.mrf.mxu0
      %v328 = vadd.f32 %v284, %v327
      %329 = vmatmul.f32.gmra.mxu0 %v263
      %v330 = vpop.f32.mrf.mxu0
      %v331 = vadd.f32 %v289, %v330
      %332 = vdwg.mxu0
      %333 = vmatpush.msra.mxu0 %v233
      %334 = vmatpush.msra.mxu0 %v232
      %335 = vmatpush.msra.mxu0 %v231
      %336 = vmatpush.msra.mxu0 %v230
      %337 = vmatpush.msra.mxu0 %v229
      %338 = vmatpush.msra.mxu0 %v228
      %339 = vmatpush.msra.mxu0 %v227
      %340 = vmatpush.msra.mxu0 %v226
      %341 = vmatpush.msra.mxu0 %v225
      %342 = vmatpush.msra.mxu0 %v224
      %343 = vmatpush.msra.mxu0 %v223
      %344 = vmatpush.msra.mxu0 %v222
      %345 = vmatpush.msra.mxu0 %v221
      %346 = vmatpush.msra.mxu0 %v220
      %347 = vmatpush.msra.mxu0 %v219
      %348 = vmatpush.msra.mxu0 %v218
      %349 = vmatmul.f32.gmra.mxu0 %v252
      %v350 = vpop.f32.mrf.mxu0
      %v351 = vadd.f32 %v322, %v350
      %352 = vmatmul.f32.gmra.mxu0 %v256
      %v353 = vpop.f32.mrf.mxu0
      %v354 = vadd.f32 %v325, %v353
      %355 = vmatmul.f32.gmra.mxu0 %v260
      %v356 = vpop.f32.mrf.mxu0
      %v357 = vadd.f32 %v328, %v356
      %358 = vmatmul.f32.gmra.mxu0 %v264
      %v359 = vpop.f32.mrf.mxu0
      %v360 = vadd.f32 %v331, %v359
      %361 = vdwg.mxu0
      %362 = vmatpush.msra.mxu0 %v249
      %363 = vmatpush.msra.mxu0 %v248
      %364 = vmatpush.msra.mxu0 %v247
      %365 = vmatpush.msra.mxu0 %v246
      %366 = vmatpush.msra.mxu0 %v245
      %367 = vmatpush.msra.mxu0 %v244
      %368 = vmatpush.msra.mxu0 %v243
      %369 = vmatpush.msra.mxu0 %v242
      %370 = vmatpush.msra.mxu0 %v241
      %371 = vmatpush.msra.mxu0 %v240
      %372 = vmatpush.msra.mxu0 %v239
      %373 = vmatpush.msra.mxu0 %v238
      %374 = vmatpush.msra.mxu0 %v237
      %375 = vmatpush.msra.mxu0 %v236
      %376 = vmatpush.msra.mxu0 %v235
      %377 = vmatpush.msra.mxu0 %v234
      %378 = vmatmul.f32.gmra.mxu0 %v253
      %v379 = vpop.f32.mrf.mxu0
      %v380 = vadd.f32 %v351, %v379
      %381 = vmatmul.f32.gmra.mxu0 %v257
      %v382 = vpop.f32.mrf.mxu0
      %v383 = vadd.f32 %v354, %v382
      %384 = vmatmul.f32.gmra.mxu0 %v261
      %v385 = vpop.f32.mrf.mxu0
      %v386 = vadd.f32 %v357, %v385
      %387 = vmatmul.f32.gmra.mxu0 %v265
      %v388 = vpop.f32.mrf.mxu0
      %v389 = vadd.f32 %v360, %v388
      %390 = vdwg.mxu0
      %391 = vmatpush.msra.mxu0 0.0
      %392 = vmatpush.msra.mxu0 0.0
      %393 = vmatpush.msra.mxu0 0.0
      %394 = vmatpush.msra.mxu0 0.0
      %395 = vmatpush.msra.mxu0 0.0
      %396 = vmatpush.msra.mxu0 0.0
      %397 = vmatpush.msra.mxu0 0.0
      %398 = vmatpush.msra.mxu0 0.0
      %399 = vmatpush.msra.mxu0 0.0
      %400 = vmatpush.msra.mxu0 0.0
      %401 = vmatpush.msra.mxu0 0.0
      %402 = vmatpush.msra.mxu0 0.0
      %403 = vmatpush.msra.mxu0 0.0
      %404 = vmatpush.msra.mxu0 0.0
      %405 = vmatpush.msra.mxu0 0.0
      %406 = vmatpush.msra.mxu0 %v250
      %407 = vmatmul.f32.gmra.mxu0 %v293
      %v408 = vpop.f32.mrf.mxu0
      %v409 = vadd.f32 %v380, %v408
      %410 = vmatmul.f32.gmra.mxu0 %v296
      %v411 = vpop.f32.mrf.mxu0
      %v412 = vadd.f32 %v383, %v411
      %413 = vmatmul.f32.gmra.mxu0 %v299
      %v414 = vpop.f32.mrf.mxu0
      %v415 = vadd.f32 %v386, %v414
      %416 = vmatmul.f32.gmra.mxu0 %v302
      %v417 = vpop.f32.mrf.mxu0
      %v418 = vadd.f32 %v389, %v417
      %419 = vdwg.mxu0
      %v420 = vmax.f32 %v409, 0.0
      %v421 = vmax.f32 %v412, 0.0
      %v422 = vmax.f32 %v415, 0.0
      %v423 = vmax.f32 %v418, 0.0
      %vm424 = vcmask 523264
      %425 = vst.msk [vmem:[%s201] sm:$0xff] %vm424, %v420
      %426 = vst.msk [vmem:[%s201 + $0x8] sm:$0xff] %vm424, %v421
      %427 = vst.msk [vmem:[%s201 + $0x10] sm:$0xff] %vm424, %v422
      %428 = vst.msk [vmem:[%s201 + $0x18] sm:$0xff] %vm424, %v423
      %p429 = scmp.lt.s32.totalorder %s18, 2
      %s430 = scalar_select %p429, %s18, 2
      %p431 = scmp.lt.s32.totalorder %s19, 0
      %s432 = scalar_select %p431, %s19, 0
      %s433 = smul.addr %s430, 4
      %s434 = sadd.s32 %s432, %s433
      %s435 = smul.addr %s434, 8
      %s436 = scalar_lea.vmem %s3, %s435
      // Predicated region
      $region33: #{conv.1} parent=31 // pred_check
        %p437 = pneg %p116
      $region34: #{conv.1} parent=31 // pred_check_branch
        %439 = sbr.rel (%p437) target = $region36
      $region35: #{conv.1} parent=31 // pred_region
        _
      $region36: #{conv.1} parent=31 // pred_fallthru
        _
    $region32: #{conv.1} parent=5 // pred_fallthru
      _
    %p440 = scmp.le.s32.totalorder 2, %s9
    // Predicated region
    $region37: #{conv.1} parent=5 // pred_check
      %p441 = pneg %p440
    $region38: #{conv.1} parent=5 // pred_check_branch
      %443 = sbr.rel (%p441) target = $region40
    $region39: #{conv.1} parent=5 // pred_region
      %s444 = ssub.s32 %s9, 2
      // Predicated region
      $region41: #{conv.1} parent=39 // pred_check
        %p445 = pneg %p122
      $region42: #{conv.1} parent=39 // pred_check_branch
        %447 = sbr.rel (%p445) target = $region44
      $region43: #{conv.1} parent=39 // pred_region
        %p448 = scmp.lt.s32.totalorder %s20, 2
        %s449 = scalar_select %p448, %s20, 2
        %p450 = scmp.lt.s32.totalorder %s21, 0
        %s451 = scalar_select %p450, %s21, 0
        %s452 = smul.addr %s449, 4
        %s453 = sadd.s32 %s451, %s452
        %s454 = smul.addr %s453, 8
        %s455 = scalar_lea.vmem %s3, %s454
      $region44: #{conv.1} parent=39 // pred_fallthru
        _
    $region40: #{conv.1} parent=5 // pred_fallthru
      _
  $region6: #{conv.1} parent=0 // loop_footer
    %s13 = sadd.s32 1, %s9
  $region7: #{conv.1} parent=0 // loop_footer_branch
    %8 = sbr.rel target = $region3
  $region8: #{conv.1} parent=0 // loop_exit
    _

</llo_original>
